<compile_context>
chip_gen: v5e
topology: v5e:2x2
jax: 0.10.0
libtpu: 0.0.40
codegen_flags: <defaults>
</compile_context>

<pallas_src>
import math
import functools

import jax
import jax.numpy as jnp
from jax.experimental import pallas as pl
from jax.experimental.pallas import tpu as pltpu


def _round_up(x, m):
    return ((x + m - 1) // m) * m


def encoder_gru_kernel(tok_ref,     # SMEM (1,) int32          scalar prefetch (used by index_map)
                       x_ref,       # VMEM (1, 1, E) f32        gathered embedding row
                       h_ref,       # VMEM (1, 2*HP) f32        packed hidden [h_f | h_b]
                       wih_ref,     # VMEM (E, 6*HP) bf16       fused input->gates weights
                       whh_ref,     # VMEM (2*HP, 6*HP) bf16    block-diag hidden->gates
                       bih_ref,     # VMEM (1, 6*HP) f32
                       bhh_ref,     # VMEM (1, 6*HP) f32
                       hnew_ref):   # VMEM out (1, 2*HP) f32
    del tok_ref                                     # only the index_map consumes it
    HP = h_ref.shape[-1] // 2

    x = x_ref[0].astype(wih_ref.dtype)              # (1, E)     bf16 MXU operand
    h = h_ref[...]                                  # (1, 2*HP)  f32

    # ---- two fused MXU pushes (both directions, all three gates) ---------------
    gi = jnp.dot(x, wih_ref[...], preferred_element_type=jnp.float32) + bih_ref[...]
    gh = jnp.dot(h.astype(whh_ref.dtype), whh_ref[...],
                 preferred_element_type=jnp.float32) + bhh_ref[...]

    # Gate lane layout: [ r_f r_b | z_f z_b | n_f n_b ], each slab HP (=k*128) lanes.
    sig = jax.nn.sigmoid(gi[:, :4 * HP] + gh[:, :4 * HP])   # r and z: one EUP chain
    r = sig[:, :2 * HP]                                      # (1, 2*HP)
    z = sig[:, 2 * HP:]                                      # (1, 2*HP)
    n = jnp.tanh(gi[:, 4 * HP:] + r * gh[:, 4 * HP:])        # (1, 2*HP)
    hnew_ref[...] = (1.0 - z) * n + z * h                    # single lane-dense store


@functools.partial(jax.jit, static_argnames=("H", "HP"))
def encoder_gru_step(tok, emb3, hidden, wih_cat, whh_bd, bih_cat, bhh_cat, *, H, HP):
    """One bidirectional GRU step. tok: (1,) int32; hidden: (2, 1, H) f32."""
    E = emb3.shape[-1]

    # pack hidden (2, 1, H) -> lane-padded kernel layout (1, 2*HP)
    h_pad = jnp.zeros((1, 2 * HP), jnp.float32)
    h_pad = jax.lax.dynamic_update_slice(h_pad, hidden[0], (0, 0))
    h_pad = jax.lax.dynamic_update_slice(h_pad, hidden[1], (0, HP))

    vmem = pl.BlockSpec(memory_space=pltpu.MemorySpace.VMEM)
    grid_spec = pltpu.PrefetchScalarGridSpec(
        num_scalar_prefetch=1,                       # token id -> SMEM
        grid=(1,),
        in_specs=[
            # data-dependent gather: pick embedding row tok[0] via the index_map
            pl.BlockSpec((1, 1, E), lambda i, tok_ref: (tok_ref[0], 0, 0)),
            vmem,                                    # packed hidden state
            vmem, vmem,                              # fused weights (bf16)
            vmem, vmem,                              # fused biases (f32)
        ],
        out_specs=vmem,
    )
    h_new = pl.pallas_call(
        encoder_gru_kernel,
        out_shape=jax.ShapeDtypeStruct((1, 2 * HP), jnp.float32),
        grid_spec=grid_spec,
        compiler_params=pltpu.CompilerParams(
            dimension_semantics=("arbitrary",),
            vmem_limit_bytes=32 * 1024 * 1024,       # explicit budget (fits all gens)
        ),
    )(tok, emb3, h_pad, wih_cat, whh_bd, bih_cat, bhh_cat)

    h_f = h_new[:, 0:H]                              # (1, H)
    h_b = h_new[:, HP:HP + H]                        # (1, H)
    # seq_len == 1: output[t=0] = concat(h_fwd, h_bwd); hidden = stacked finals.
    output = jnp.concatenate([h_f, h_b], axis=-1).reshape(1, 1, 2 * H)
    hidden_new = jnp.concatenate([h_f, h_b], axis=0).reshape(2, 1, H)
    return output, hidden_new


class EncoderRNNPallas:
    """JAX/Pallas re-implementation of EncoderRNN.forward (one bidirectional GRU step)."""

    def __init__(self, input_size, hidden_size, output_size, word_vectors,
                 drop_rate=0.2, key=jax.random.PRNGKey(0)):
        del input_size, drop_rate                    # unused by forward(); kept for parity
        H = int(hidden_size)
        V, E = word_vectors.shape
        HP = _round_up(H, 128)                       # lane-padded hidden width (128-aligned)
        self.hidden_size = H
        self.output_size = output_size
        self.H, self.E, self.V, self.HP = H, E, V, HP

        bound = 1.0 / math.sqrt(H)
        keys = jax.random.split(key, 12)

        def u(k, shape):
            return jax.random.uniform(k, shape, jnp.float32, -bound, bound)

        # Raw PyTorch-layout GRU params (f32) — used by the pure-JAX reference.
        self.w_ih = jnp.stack([u(keys[0], (3 * H, E)), u(keys[1], (3 * H, E))])   # (2,3H,E)
        self.w_hh = jnp.stack([u(keys[2], (3 * H, H)), u(keys[3], (3 * H, H))])   # (2,3H,H)
        self.b_ih = jnp.stack([u(keys[4], (3 * H,)), u(keys[5], (3 * H,))])       # (2,3H)
        self.b_hh = jnp.stack([u(keys[6], (3 * H,)), u(keys[7], (3 * H,))])       # (2,3H)

        # ---- packed, lane-dense kernel weights -------------------------------
        # Gate lane order: [ r_f r_b | z_f z_b | n_f n_b ]; hidden lane order: [ h_f | h_b ].
        # (At production sizes pick H as a multiple of 128 so HP == H and there is no pad;
        #  for very large H, tile the 6*HP axis with a grid dim instead of the block-diag.)
        wih_cat = jnp.zeros((E, 6 * HP), jnp.float32)
        whh_bd = jnp.zeros((2 * HP, 6 * HP), jnp.float32)    # block-diag over directions
        bih_cat = jnp.zeros((1, 6 * HP), jnp.float32)
        bhh_cat = jnp.zeros((1, 6 * HP), jnp.float32)
        for g in range(3):              # 0:r 1:z 2:n (PyTorch gate order)
            for d in range(2):          # 0:forward 1:reverse
                col = (2 * g + d) * HP
                wih_cat = wih_cat.at[:, col:col + H].set(
                    self.w_ih[d, g * H:(g + 1) * H, :].T)
                whh_bd = whh_bd.at[d * HP:d * HP + H, col:col + H].set(
                    self.w_hh[d, g * H:(g + 1) * H, :].T)
                bih_cat = bih_cat.at[0, col:col + H].set(self.b_ih[d, g * H:(g + 1) * H])
                bhh_cat = bhh_cat.at[0, col:col + H].set(self.b_hh[d, g * H:(g + 1) * H])
        self.wih_cat = wih_cat.astype(jnp.bfloat16)          # bf16 MXU operands
        self.whh_bd = whh_bd.astype(jnp.bfloat16)
        self.bih_cat = bih_cat                               # biases stay f32
        self.bhh_cat = bhh_cat

        # Embedding table (f32). Stored as (V, 1, E) so the BlockSpec-gathered row is a
        # leading-dim block whose last-two dims equal the array's last-two dims.
        self.embedding = jnp.asarray(word_vectors, dtype=jnp.float32)             # (V, E)
        self.embedding3 = self.embedding.reshape(V, 1, E)                          # (V, 1, E)

        # out_1 / out_2 / dropout exist in the module but are NOT used in forward();
        # initialized only for shape fidelity.
        # TODO(synk): out_1/drop_1/out_2 are dead in EncoderRNN.forward(); not lowered.
        self.out_1_w = u(keys[8], (H, 4 * H))
        self.out_1_b = u(keys[9], (H,))
        self.out_2_w = u(keys[10], (output_size, H))
        self.out_2_b = u(keys[11], (output_size,))

    def init_hidden(self):
        return jnp.zeros((2, 1, self.hidden_size), jnp.float32)

    def forward(self, token_id, hidden):
        tok = jnp.asarray(token_id, jnp.int32).reshape(1)
        return encoder_gru_step(tok, self.embedding3, hidden,
                                self.wih_cat, self.whh_bd, self.bih_cat, self.bhh_cat,
                                H=self.H, HP=self.HP)

    def forward_ref(self, token_id, hidden):
        """Pure-JAX f32 reference (PyTorch GRU math) for correctness checking."""
        H = self.H
        x = jnp.take(self.embedding, token_id, axis=0).reshape(1, -1)   # (1, E)
        h2 = hidden[:, 0, :]                                            # (2, H)
        outs = []
        for d in range(2):
            gi = x @ self.w_ih[d].T + self.b_ih[d]
            gh = h2[d:d + 1] @ self.w_hh[d].T + self.b_hh[d]
            r = jax.nn.sigmoid(gi[:, :H] + gh[:, :H])
            z = jax.nn.sigmoid(gi[:, H:2 * H] + gh[:, H:2 * H])
            n = jnp.tanh(gi[:, 2 * H:] + r * gh[:, 2 * H:])
            outs.append((1.0 - z) * n + z * h2[d:d + 1])
        h_new = jnp.concatenate(outs, axis=0)
        return h_new.reshape(1, 1, 2 * H), h_new.reshape(2, 1, H)


if __name__ == "__main__":
    key = jax.random.PRNGKey(0)
    k_wv, k_params = jax.random.split(key)

    vocab, emb_dim, hidden_size, output_size = 16, 32, 32, 8
    word_vectors = jax.random.normal(k_wv, (vocab, emb_dim), jnp.float32) * 0.1

    enc = EncoderRNNPallas(emb_dim, hidden_size, output_size, word_vectors, key=k_params)

    token = jnp.array(3, dtype=jnp.int32)          # single input token index
    hidden0 = enc.init_hidden()                    # (2, 1, H) zeros

    output, hidden = enc.forward(token, hidden0)
    jax.block_until_ready((output, hidden))

    # sanity: shapes + agreement with the pure-JAX f32 reference
    out_ref, hid_ref = enc.forward_ref(token, hidden0)
    assert output.shape == (1, 1, 2 * hidden_size)
    assert hidden.shape == (2, 1, hidden_size)
    # bf16 matmul operands -> relaxed tolerance vs. the f32 reference
    assert jnp.allclose(output, out_ref, atol=2e-2), "output mismatch vs reference (step 1)"
    assert jnp.allclose(hidden, hid_ref, atol=2e-2), "hidden mismatch vs reference (step 1)"

    # second step with a non-zero hidden state (exercises the recurrence path)
    token2 = jnp.array(5, dtype=jnp.int32)
    output2, hidden2 = enc.forward(token2, hidden)
    jax.block_until_ready((output2, hidden2))
    out_ref2, hid_ref2 = enc.forward_ref(token2, hidden)
    assert jnp.allclose(output2, out_ref2, atol=2e-2), "output mismatch vs reference (step 2)"
    assert jnp.allclose(hidden2, hid_ref2, atol=2e-2), "hidden mismatch vs reference (step 2)"

    print("KERNEL_OK")
</pallas_src>

<mosaic_0001>
module attributes {stable_mosaic.version = 11 : i64} {
  func.func @encoder_gru_kernel(%arg0: i32, %arg1: memref<1xi32, #tpu.memory_space<smem>>, %arg2: memref<1x1x32xf32, #tpu.memory_space<vmem>>, %arg3: memref<1x256xf32, #tpu.memory_space<vmem>>, %arg4: memref<32x768xbf16, #tpu.memory_space<vmem>>, %arg5: memref<256x768xbf16, #tpu.memory_space<vmem>>, %arg6: memref<1x768xf32, #tpu.memory_space<vmem>>, %arg7: memref<1x768xf32, #tpu.memory_space<vmem>>, %arg8: memref<1x256xf32, #tpu.memory_space<vmem>>) attributes {dimension_semantics = [#tpu.dimension_semantics<arbitrary>], iteration_bounds = array<i64: 1>, scalar_prefetch = 1 : i64, scratch_operands = 0 : i64, tpu.core_type = #tpu.core_type<tc>, window_params = [{transform_indices = @transform_0, window_bounds = array<i64: 1, 1, 32>}, {pipeline_mode = #tpu.pipeline_mode<synchronous>, transform_indices = @transform_1, window_bounds = array<i64: 1, 256>}, {pipeline_mode = #tpu.pipeline_mode<synchronous>, transform_indices = @transform_2, window_bounds = array<i64: 32, 768>}, {pipeline_mode = #tpu.pipeline_mode<synchronous>, transform_indices = @transform_3, window_bounds = array<i64: 256, 768>}, {pipeline_mode = #tpu.pipeline_mode<synchronous>, transform_indices = @transform_4, window_bounds = array<i64: 1, 768>}, {pipeline_mode = #tpu.pipeline_mode<synchronous>, transform_indices = @transform_5, window_bounds = array<i64: 1, 768>}, {pipeline_mode = #tpu.pipeline_mode<synchronous>, transform_indices = @transform_6, window_bounds = array<i64: 1, 256>}]} {
    %c0 = arith.constant 0 : index
    %c0_0 = arith.constant 0 : index
    %c0_1 = arith.constant 0 : index
    %0 = vector.load %arg2[%c0, %c0_0, %c0_1] : memref<1x1x32xf32, #tpu.memory_space<vmem>>, vector<1x1x32xf32>
    %1 = vector.shape_cast %0 : vector<1x1x32xf32> to vector<1x32xf32>
    %2 = arith.truncf %1 : vector<1x32xf32> to vector<1x32xbf16>
    %c0_2 = arith.constant 0 : index
    %c0_3 = arith.constant 0 : index
    %3 = vector.load %arg3[%c0_2, %c0_3] : memref<1x256xf32, #tpu.memory_space<vmem>>, vector<1x256xf32>
    %c0_4 = arith.constant 0 : index
    %c0_5 = arith.constant 0 : index
    %4 = vector.load %arg4[%c0_4, %c0_5] : memref<32x768xbf16, #tpu.memory_space<vmem>>, vector<32x768xbf16>
    %cst = arith.constant dense<0.000000e+00> : vector<1x768xf32>
    %5 = tpu.matmul %2, %4, %cst {dimension_numbers = #tpu.dot_dimension_numbers<[1], [0], [0], [1], [0, 0, 1, 1], [], []>} : vector<1x32xbf16>, vector<32x768xbf16>, vector<1x768xf32> -> vector<1x768xf32>
    %c0_6 = arith.constant 0 : index
    %c0_7 = arith.constant 0 : index
    %6 = vector.load %arg6[%c0_6, %c0_7] : memref<1x768xf32, #tpu.memory_space<vmem>>, vector<1x768xf32>
    %7 = arith.addf %5, %6 : vector<1x768xf32>
    %8 = arith.truncf %3 : vector<1x256xf32> to vector<1x256xbf16>
    %c0_8 = arith.constant 0 : index
    %c0_9 = arith.constant 0 : index
    %9 = vector.load %arg5[%c0_8, %c0_9] : memref<256x768xbf16, #tpu.memory_space<vmem>>, vector<256x768xbf16>
    %cst_10 = arith.constant dense<0.000000e+00> : vector<1x768xf32>
    %10 = tpu.matmul %8, %9, %cst_10 {dimension_numbers = #tpu.dot_dimension_numbers<[1], [0], [0], [1], [0, 0, 1, 1], [], []>} : vector<1x256xbf16>, vector<256x768xbf16>, vector<1x768xf32> -> vector<1x768xf32>
    %c0_11 = arith.constant 0 : index
    %c0_12 = arith.constant 0 : index
    %11 = vector.load %arg7[%c0_11, %c0_12] : memref<1x768xf32, #tpu.memory_space<vmem>>, vector<1x768xf32>
    %12 = arith.addf %10, %11 : vector<1x768xf32>
    %13 = vector.extract_strided_slice %7 {offsets = [0, 0], sizes = [1, 512], strides = [1, 1]} : vector<1x768xf32> to vector<1x512xf32>
    %14 = vector.extract_strided_slice %12 {offsets = [0, 0], sizes = [1, 512], strides = [1, 1]} : vector<1x768xf32> to vector<1x512xf32>
    %15 = arith.addf %13, %14 : vector<1x512xf32>
    %16 = arith.negf %15 : vector<1x512xf32>
    %17 = math.exp %16 : vector<1x512xf32>
    %cst_13 = arith.constant 1.000000e+00 : f32
    %18 = vector.broadcast %cst_13 : f32 to vector<1x512xf32>
    %19 = arith.addf %18, %17 : vector<1x512xf32>
    %20 = arith.divf %18, %19 : vector<1x512xf32>
    %21 = vector.extract_strided_slice %20 {offsets = [0, 0], sizes = [1, 256], strides = [1, 1]} : vector<1x512xf32> to vector<1x256xf32>
    %22 = vector.extract_strided_slice %20 {offsets = [0, 256], sizes = [1, 256], strides = [1, 1]} : vector<1x512xf32> to vector<1x256xf32>
    %23 = vector.extract_strided_slice %7 {offsets = [0, 512], sizes = [1, 256], strides = [1, 1]} : vector<1x768xf32> to vector<1x256xf32>
    %24 = vector.extract_strided_slice %12 {offsets = [0, 512], sizes = [1, 256], strides = [1, 1]} : vector<1x768xf32> to vector<1x256xf32>
    %25 = arith.mulf %21, %24 : vector<1x256xf32>
    %26 = arith.addf %23, %25 : vector<1x256xf32>
    %27 = math.tanh %26 : vector<1x256xf32>
    %cst_14 = arith.constant 1.000000e+00 : f32
    %28 = vector.broadcast %cst_14 : f32 to vector<1x256xf32>
    %29 = arith.subf %28, %22 : vector<1x256xf32>
    %30 = arith.mulf %29, %27 : vector<1x256xf32>
    %31 = arith.mulf %22, %3 : vector<1x256xf32>
    %32 = arith.addf %30, %31 : vector<1x256xf32>
    %c0_15 = arith.constant 0 : index
    %c0_16 = arith.constant 0 : index
    %33 = vector.load %arg8[%c0_15, %c0_16] : memref<1x256xf32, #tpu.memory_space<vmem>>, vector<1x256xf32>
    tpu.vector_store %arg8[%c0_15, %c0_16], %32 {strides = array<i32>} : memref<1x256xf32, #tpu.memory_space<vmem>>, vector<1x256xf32>,
    return
  }
  func.func @transform_0(%arg0: i32, %arg1: memref<1xi32, #tpu.memory_space<smem>>) -> (i32, i32, i32) {
    %c0 = arith.constant 0 : index
    %0 = memref.load %arg1[%c0] : memref<1xi32, #tpu.memory_space<smem>>
    %c0_i32 = arith.constant 0 : i32
    %c0_i32_0 = arith.constant 0 : i32
    %c0_i32_1 = arith.constant 0 : i32
    return %0, %c0_i32, %c0_i32_0 : i32, i32, i32
  }
  func.func @transform_1(%arg0: i32, %arg1: memref<1xi32, #tpu.memory_space<smem>>) -> (i32, i32) {
    %c0_i32 = arith.constant 0 : i32
    %c0_i32_0 = arith.constant 0 : i32
    %c0_i32_1 = arith.constant 0 : i32
    return %c0_i32, %c0_i32_0 : i32, i32
  }
  func.func @transform_2(%arg0: i32, %arg1: memref<1xi32, #tpu.memory_space<smem>>) -> (i32, i32) {
    %c0_i32 = arith.constant 0 : i32
    %c0_i32_0 = arith.constant 0 : i32
    %c0_i32_1 = arith.constant 0 : i32
    return %c0_i32, %c0_i32_0 : i32, i32
  }
  func.func @transform_3(%arg0: i32, %arg1: memref<1xi32, #tpu.memory_space<smem>>) -> (i32, i32) {
    %c0_i32 = arith.constant 0 : i32
    %c0_i32_0 = arith.constant 0 : i32
    %c0_i32_1 = arith.constant 0 : i32
    return %c0_i32, %c0_i32_0 : i32, i32
  }
  func.func @transform_4(%arg0: i32, %arg1: memref<1xi32, #tpu.memory_space<smem>>) -> (i32, i32) {
    %c0_i32 = arith.constant 0 : i32
    %c0_i32_0 = arith.constant 0 : i32
    %c0_i32_1 = arith.constant 0 : i32
    return %c0_i32, %c0_i32_0 : i32, i32
  }
  func.func @transform_5(%arg0: i32, %arg1: memref<1xi32, #tpu.memory_space<smem>>) -> (i32, i32) {
    %c0_i32 = arith.constant 0 : i32
    %c0_i32_0 = arith.constant 0 : i32
    %c0_i32_1 = arith.constant 0 : i32
    return %c0_i32, %c0_i32_0 : i32, i32
  }
  func.func @transform_6(%arg0: i32, %arg1: memref<1xi32, #tpu.memory_space<smem>>) -> (i32, i32) {
    %c0_i32 = arith.constant 0 : i32
    %c0_i32_0 = arith.constant 0 : i32
    %c0_i32_1 = arith.constant 0 : i32
    return %c0_i32, %c0_i32_0 : i32, i32
  }
}

</mosaic_0001>

<llo_original>
// kernel: encoder_gru_step.1
$region0: #{encoder_gru_step.1}
  #allocation0 [shape = 'u32[]', space=smem, size = 0x4, offset = 0x4, fixed_abs, tag = 'smem constant byte address 0x4 - core index']
  #allocation1 [shape = 'u32[72,128]{1,0:T(1,128)}', space=vmem, size = 0x9000, scoped, tag = 'internal scratch']
  #allocation2 [shape = 's32[1]{0}', space=sflag, size = 0x4, scoped, tag = 'scoped memory for encoder_gru_step.1']
  #allocation3 [shape = 's32[1]{0:T(128)S(6)}', space=smem, size = 0x200, scoped, tag = 'prefetched SMEM operand 0']
  %s0 = inlined_call_operand.<no memory space> [shape: s32[1], index: 0, kind: input, shape index: {}]
  %s1 = inlined_call_operand.vmem [shape: f32[16,1,32], index: 1, kind: input, shape index: {}]
  %s2 = inlined_call_operand.vmem [shape: f32[1,256], index: 2, kind: input, shape index: {}]
  %s3 = inlined_call_operand.hbm [shape: bf16[32,768], index: 3, kind: input, shape index: {}]
  %s4 = inlined_call_operand.hbm [shape: bf16[256,768], index: 4, kind: input, shape index: {}]
  %s5 = inlined_call_operand.hbm [shape: f32[1,768], index: 5, kind: input, shape index: {}]
  %s6 = inlined_call_operand.hbm [shape: f32[1,768], index: 6, kind: input, shape index: {}]
  %s7 = inlined_call_operand.vmem [shape: f32[1,256], index: 7, kind: output, shape index: {}]
  %s8 = sld [smem:[#allocation0]]
  $region50: #{encoder_gru_step.1} parent=0
    _
  %s10 = ssub.s32 1, %s8
  %s11 = scalar_select 0, %s10, %s8
  %12 = sst [smem:[#allocation3]] %s0
  $region1: #{encoder_gru_step.1} parent=0
    #allocation4 [shape = 'u8[49152]{0}', space=vmem, size = 0xc000, scoped, tag = 'input window, operand 3, single buffered']
    #allocation5 [shape = 's32[1]{0}', space=sflag, size = 0x4, scoped, tag = 'scoped memory for encoder_gru_step.1']
    #allocation6 [shape = 'u8[393216]{0}', space=vmem, size = 0x60000, scoped, tag = 'input window, operand 4, single buffered']
    #allocation7 [shape = 's32[1]{0}', space=sflag, size = 0x4, scoped, tag = 'scoped memory for encoder_gru_step.1']
    #allocation8 [shape = 'u8[3072]{0}', space=vmem, size = 0xc00, scoped, tag = 'input window, operand 5, single buffered']
    #allocation9 [shape = 'u8[3072]{0}', space=vmem, size = 0xc00, scoped, tag = 'input window, operand 6, single buffered']
    #allocation10 [shape = 's32[1]{0}', space=sflag, size = 0x4, scoped, tag = 'scoped memory for encoder_gru_step.1']
    %13 = vsyncpa [#allocation5], 0
    %14 = vsyncpa [#allocation7], 0
    %15 = vsyncpa [#allocation10], 0
    // Predicated region
    $region2: #{encoder_gru_step.1} parent=1 // pred_check
      _
    $region3: #{encoder_gru_step.1} parent=1 // pred_check_branch
      %17 = sbr.rel (0) target = $region5
    $region4: #{encoder_gru_step.1} parent=1 // pred_region
      %s18 = sld [smem:[#allocation3]]
      %p19 = scmp.lt.s32.totalorder %s18, 15
      %s20 = scalar_select %p19, %s18, 15
      %s21 = scalar_lea.vmem %s1, %s20
      %s22 = sld [smem:[#allocation3]]
    $region5: #{encoder_gru_step.1} parent=1 // pred_fallthru
      _
    // Predicated region
    $region6: #{encoder_gru_step.1} parent=1 // pred_check
      _
    $region7: #{encoder_gru_step.1} parent=1 // pred_check_branch
      %24 = sbr.rel (0) target = $region9
    $region8: #{encoder_gru_step.1} parent=1 // pred_region
      _
    $region9: #{encoder_gru_step.1} parent=1 // pred_fallthru
      _
    // Predicated region
    $region10: #{encoder_gru_step.1} parent=1 // pred_check
      _
    $region11: #{encoder_gru_step.1} parent=1 // pred_check_branch
      %26 = sbr.rel (0) target = $region13
    $region12: #{encoder_gru_step.1} parent=1 // pred_region
      %28 = vsyncadd [#allocation5], 0
      %s29 = sshll.u32 %s3, 4
      %s30 = int_to_ptr.hbm [resolvable:$true] %s29
      %s31 = sshll.u32 [#allocation4], 4
      %s32 = int_to_ptr.vmem [resolvable:$true] %s31
      %37 = dma.hbm_to_vmem [thread:$0]  %s30, 1536, %s32, [#allocation5], 384, 384, 24
    $region13: #{encoder_gru_step.1} parent=1 // pred_fallthru
      _
    // Predicated region
    $region14: #{encoder_gru_step.1} parent=1 // pred_check
      _
    $region15: #{encoder_gru_step.1} parent=1 // pred_check_branch
      %39 = sbr.rel (0) target = $region17
    $region16: #{encoder_gru_step.1} parent=1 // pred_region
      %41 = vsyncadd [#allocation7], 0
      %s42 = sshll.u32 %s4, 4
      %s43 = int_to_ptr.hbm [resolvable:$true] %s42
      %s44 = sshll.u32 [#allocation6], 4
      %s45 = int_to_ptr.vmem [resolvable:$true] %s44
      %50 = dma.hbm_to_vmem [thread:$0]  %s43, 12288, %s45, [#allocation7], 384, 384, 24
    $region17: #{encoder_gru_step.1} parent=1 // pred_fallthru
      _
    // Predicated region
    $region18: #{encoder_gru_step.1} parent=1 // pred_check
      _
    $region19: #{encoder_gru_step.1} parent=1 // pred_check_branch
      %52 = sbr.rel (0) target = $region21
    $region20: #{encoder_gru_step.1} parent=1 // pred_region
      %54 = vsyncadd [#allocation7], 0
      %s56 = sshll.u32 %s5, 4
      %s57 = int_to_ptr.hbm [resolvable:$true] %s56
      %s58 = sshll.u32 [#allocation8], 4
      %s59 = int_to_ptr.vmem [resolvable:$true] %s58
      %61 = dma.hbm_to_vmem [thread:$0]  %s57, 96, %s59, [#allocation7]
    $region21: #{encoder_gru_step.1} parent=1 // pred_fallthru
      _
    // Predicated region
    $region22: #{encoder_gru_step.1} parent=1 // pred_check
      _
    $region23: #{encoder_gru_step.1} parent=1 // pred_check_branch
      %63 = sbr.rel (0) target = $region25
    $region24: #{encoder_gru_step.1} parent=1 // pred_region
      %65 = vsyncadd [#allocation10], 0
      %s67 = sshll.u32 %s6, 4
      %s68 = int_to_ptr.hbm [resolvable:$true] %s67
      %s69 = sshll.u32 [#allocation9], 4
      %s70 = int_to_ptr.vmem [resolvable:$true] %s69
      %72 = dma.hbm_to_vmem [thread:$0]  %s68, 96, %s70, [#allocation10]
    $region25: #{encoder_gru_step.1} parent=1 // pred_fallthru
      _
    // Predicated region
    $region26: #{encoder_gru_step.1} parent=1 // pred_check
      _
    $region27: #{encoder_gru_step.1} parent=1 // pred_check_branch
      %74 = sbr.rel (0) target = $region29
    $region28: #{encoder_gru_step.1} parent=1 // pred_region
      %76 = dma.done [#allocation5], 1536
    $region29: #{encoder_gru_step.1} parent=1 // pred_fallthru
      _
    // Predicated region
    $region30: #{encoder_gru_step.1} parent=1 // pred_check
      _
    $region31: #{encoder_gru_step.1} parent=1 // pred_check_branch
      %78 = sbr.rel (0) target = $region33
    $region32: #{encoder_gru_step.1} parent=1 // pred_region
      %80 = dma.done [#allocation7], 12288
    $region33: #{encoder_gru_step.1} parent=1 // pred_fallthru
      _
    // Predicated region
    $region34: #{encoder_gru_step.1} parent=1 // pred_check
      _
    $region35: #{encoder_gru_step.1} parent=1 // pred_check_branch
      %82 = sbr.rel (0) target = $region37
    $region36: #{encoder_gru_step.1} parent=1 // pred_region
      %84 = dma.done [#allocation7], 96
    $region37: #{encoder_gru_step.1} parent=1 // pred_fallthru
      _
    // Predicated region
    $region38: #{encoder_gru_step.1} parent=1 // pred_check
      _
    $region39: #{encoder_gru_step.1} parent=1 // pred_check_branch
      %86 = sbr.rel (0) target = $region41
    $region40: #{encoder_gru_step.1} parent=1 // pred_region
      %88 = dma.done [#allocation10], 96
    $region41: #{encoder_gru_step.1} parent=1 // pred_fallthru
      _
    %s89 = sld [smem:[#allocation3]]
    %p90 = scmp.lt.s32.totalorder %s89, 15
    %s91 = scalar_select %p90, %s89, 15
    %s92 = scalar_lea.vmem %s1, %s91
    %s93 = sld [smem:[#allocation3]]
    %p94 = scmp.lt.s32.totalorder %s93, 15
    %s95 = scalar_select %p94, %s93, 15
    %s96 = scalar_lea.vmem %s1, %s95
    %s97 = sld [smem:[#allocation3]]
    %v99 = vld [vmem:[%s96] sm:$0x1]
    %v100 = vpack.c.bf16 %v99, %v99
    %v101 = vld [vmem:[%s2] sm:$0x3]
    %v102 = vld [vmem:[#allocation4] sm:$0xff]
    %v103 = vld [vmem:[#allocation4 + $0x8] sm:$0xff]
    %v104 = vld [vmem:[#allocation4 + $0x10] sm:$0xff]
    %v105 = vld [vmem:[#allocation4 + $0x18] sm:$0xff]
    %v106 = vld [vmem:[#allocation4 + $0x20] sm:$0xff]
    %v107 = vld [vmem:[#allocation4 + $0x28] sm:$0xff]
    %v108 = vld [vmem:[#allocation4 + $0x30] sm:$0xff]
    %v109 = vld [vmem:[#allocation4 + $0x38] sm:$0xff]
    %v110 = vld [vmem:[#allocation4 + $0x40] sm:$0xff]
    %v111 = vld [vmem:[#allocation4 + $0x48] sm:$0xff]
    %v112 = vld [vmem:[#allocation4 + $0x50] sm:$0xff]
    %v113 = vld [vmem:[#allocation4 + $0x58] sm:$0xff]
    %v114 = vld [vmem:[#allocation8] sm:$0x3f]
    %v127 = vunpack.c.l.b16 %v102
    %v128 = vunpack.c.h.b16 %v102
    %v129 = vunpack.c.l.b16 %v103
    %v130 = vunpack.c.h.b16 %v103
    %v131 = vunpack.c.l.b16 %v104
    %v132 = vunpack.c.h.b16 %v104
    %v133 = vunpack.c.l.b16 %v105
    %v134 = vunpack.c.h.b16 %v105
    %v135 = vunpack.c.l.b16 %v106
    %v136 = vunpack.c.h.b16 %v106
    %v137 = vunpack.c.l.b16 %v107
    %v138 = vunpack.c.h.b16 %v107
    %v139 = vunpack.c.l.b16 %v108
    %v140 = vunpack.c.h.b16 %v108
    %v141 = vunpack.c.l.b16 %v109
    %v142 = vunpack.c.h.b16 %v109
    %v143 = vunpack.c.l.b16 %v110
    %v144 = vunpack.c.h.b16 %v110
    %v145 = vunpack.c.l.b16 %v111
    %v146 = vunpack.c.h.b16 %v111
    %v147 = vunpack.c.l.b16 %v112
    %v148 = vunpack.c.h.b16 %v112
    %v149 = vunpack.c.l.b16 %v113
    %v150 = vunpack.c.h.b16 %v113
    %v151 = vpack.c.b16 %v133, %v127
    %v152 = vpack.c.b16 %v134, %v128
    %v153 = vpack.c.b16 %v135, %v129
    %v154 = vpack.c.b16 %v136, %v130
    %v155 = vpack.c.b16 %v137, %v131
    %v156 = vpack.c.b16 %v138, %v132
    %v157 = vpack.c.b16 %v145, %v139
    %v158 = vpack.c.b16 %v146, %v140
    %v159 = vpack.c.b16 %v147, %v141
    %v160 = vpack.c.b16 %v148, %v142
    %v161 = vpack.c.b16 %v149, %v143
    %v162 = vpack.c.b16 %v150, %v144
    %v176 = vperm.slane %v114, 0
    %v177 = vperm.slane %v114, 1
    %v178 = vperm.slane %v114, 2
    %v179 = vperm.slane %v114, 3
    %v180 = vperm.slane %v114, 4
    %v181 = vperm.slane %v114, 5
    %vm188 = vcmask 261120
    %v190 = vsel %vm188, %v100, 0
    %192 = vmatpush.bf16.msra.mxu0 0
    %193 = vmatpush.bf16.msra.mxu0 0
    %194 = vmatpush.bf16.msra.mxu0 0
    %195 = vmatpush.bf16.msra.mxu0 0
    %196 = vmatpush.bf16.msra.mxu0 0
    %197 = vmatpush.bf16.msra.mxu0 0
    %198 = vmatpush.bf16.msra.mxu0 %v157
    %199 = vmatpush.bf16.msra.mxu0 %v151
    %200 = vmatmul.bf16.gmra.mxu0 %v190
    %v201 = vpop.f32.mrf.mxu0
    %v202 = vadd.f32 %v176, %v201
    %v203 = vpop.f32.mrf.mxu0
    %204 = vdwg.mxu0
    %205 = vmatpush.bf16.msra.mxu0 0
    %206 = vmatpush.bf16.msra.mxu0 0
    %207 = vmatpush.bf16.msra.mxu0 0
    %208 = vmatpush.bf16.msra.mxu0 0
    %209 = vmatpush.bf16.msra.mxu0 0
    %210 = vmatpush.bf16.msra.mxu0 0
    %211 = vmatpush.bf16.msra.mxu0 %v158
    %212 = vmatpush.bf16.msra.mxu0 %v152
    %213 = vmatmul.bf16.gmra.mxu0 %v190
    %v214 = vpop.f32.mrf.mxu0
    %v215 = vadd.f32 %v177, %v214
    %v216 = vpop.f32.mrf.mxu0
    %217 = vdwg.mxu0
    %218 = vmatpush.bf16.msra.mxu0 0
    %219 = vmatpush.bf16.msra.mxu0 0
    %220 = vmatpush.bf16.msra.mxu0 0
    %221 = vmatpush.bf16.msra.mxu0 0
    %222 = vmatpush.bf16.msra.mxu0 0
    %223 = vmatpush.bf16.msra.mxu0 0
    %224 = vmatpush.bf16.msra.mxu0 %v159
    %225 = vmatpush.bf16.msra.mxu0 %v153
    %226 = vmatmul.bf16.gmra.mxu0 %v190
    %v227 = vpop.f32.mrf.mxu0
    %v228 = vadd.f32 %v178, %v227
    %v229 = vpop.f32.mrf.mxu0
    %230 = vdwg.mxu0
    %231 = vmatpush.bf16.msra.mxu0 0
    %232 = vmatpush.bf16.msra.mxu0 0
    %233 = vmatpush.bf16.msra.mxu0 0
    %234 = vmatpush.bf16.msra.mxu0 0
    %235 = vmatpush.bf16.msra.mxu0 0
    %236 = vmatpush.bf16.msra.mxu0 0
    %237 = vmatpush.bf16.msra.mxu0 %v160
    %238 = vmatpush.bf16.msra.mxu0 %v154
    %239 = vmatmul.bf16.gmra.mxu0 %v190
    %v240 = vpop.f32.mrf.mxu0
    %v241 = vadd.f32 %v179, %v240
    %v242 = vpop.f32.mrf.mxu0
    %243 = vdwg.mxu0
    %244 = vmatpush.bf16.msra.mxu0 0
    %245 = vmatpush.bf16.msra.mxu0 0
    %246 = vmatpush.bf16.msra.mxu0 0
    %247 = vmatpush.bf16.msra.mxu0 0
    %248 = vmatpush.bf16.msra.mxu0 0
    %249 = vmatpush.bf16.msra.mxu0 0
    %250 = vmatpush.bf16.msra.mxu0 %v161
    %251 = vmatpush.bf16.msra.mxu0 %v155
    %252 = vmatmul.bf16.gmra.mxu0 %v190
    %v253 = vpop.f32.mrf.mxu0
    %v254 = vadd.f32 %v180, %v253
    %v255 = vpop.f32.mrf.mxu0
    %256 = vdwg.mxu0
    %257 = vmatpush.bf16.msra.mxu0 0
    %258 = vmatpush.bf16.msra.mxu0 0
    %259 = vmatpush.bf16.msra.mxu0 0
    %260 = vmatpush.bf16.msra.mxu0 0
    %261 = vmatpush.bf16.msra.mxu0 0
    %262 = vmatpush.bf16.msra.mxu0 0
    %263 = vmatpush.bf16.msra.mxu0 %v162
    %264 = vmatpush.bf16.msra.mxu0 %v156
    %265 = vmatmul.bf16.gmra.mxu0 %v190
    %v266 = vpop.f32.mrf.mxu0
    %v267 = vadd.f32 %v181, %v266
    %v268 = vpop.f32.mrf.mxu0
    %269 = vdwg.mxu0
    %v271 = vperm.slane %v101, 0
    %v272 = vperm.slane %v101, 1
    %v275 = vpack.c.bf16 %v271, %v271
    %v276 = vpack.c.bf16 %v272, %v272
    %v277 = vld [vmem:[#allocation6] sm:$0xff]
    %v278 = vld [vmem:[#allocation6 + $0x8] sm:$0xff]
    %v279 = vld [vmem:[#allocation6 + $0x10] sm:$0xff]
    %v280 = vld [vmem:[#allocation6 + $0x18] sm:$0xff]
    %v281 = vld [vmem:[#allocation6 + $0x20] sm:$0xff]
    %v282 = vld [vmem:[#allocation6 + $0x28] sm:$0xff]
    %v283 = vld [vmem:[#allocation6 + $0x30] sm:$0xff]
    %v284 = vld [vmem:[#allocation6 + $0x38] sm:$0xff]
    %v285 = vld [vmem:[#allocation6 + $0x40] sm:$0xff]
    %v286 = vld [vmem:[#allocation6 + $0x48] sm:$0xff]
    %v287 = vld [vmem:[#allocation6 + $0x50] sm:$0xff]
    %v288 = vld [vmem:[#allocation6 + $0x58] sm:$0xff]
    %v289 = vld [vmem:[#allocation6 + $0x60] sm:$0xff]
    %v290 = vld [vmem:[#allocation6 + $0x68] sm:$0xff]
    %v291 = vld [vmem:[#allocation6 + $0x70] sm:$0xff]
    %v292 = vld [vmem:[#allocation6 + $0x78] sm:$0xff]
    %v293 = vld [vmem:[#allocation6 + $0x80] sm:$0xff]
    %v294 = vld [vmem:[#allocation6 + $0x88] sm:$0xff]
    %v295 = vld [vmem:[#allocation6 + $0x90] sm:$0xff]
    %v296 = vld [vmem:[#allocation6 + $0x98] sm:$0xff]
    %v297 = vld [vmem:[#allocation6 + $0xa0] sm:$0xff]
    %v298 = vld [vmem:[#allocation6 + $0xa8] sm:$0xff]
    %v299 = vld [vmem:[#allocation6 + $0xb0] sm:$0xff]
    %v300 = vld [vmem:[#allocation6 + $0xb8] sm:$0xff]
    %v301 = vld [vmem:[#allocation6 + $0xc0] sm:$0xff]
    %v302 = vld [vmem:[#allocation6 + $0xc8] sm:$0xff]
    %v303 = vld [vmem:[#allocation6 + $0xd0] sm:$0xff]
    %v304 = vld [vmem:[#allocation6 + $0xd8] sm:$0xff]
    %v305 = vld [vmem:[#allocation6 + $0xe0] sm:$0xff]
    %v306 = vld [vmem:[#allocation6 + $0xe8] sm:$0xff]
    %v307 = vld [vmem:[#allocation6 + $0xf0] sm:$0xff]
    %v308 = vld [vmem:[#allocation6 + $0xf8] sm:$0xff]
    %v309 = vld [vmem:[#allocation6 + $0x100] sm:$0xff]
    %v310 = vld [vmem:[#allocation6 + $0x108] sm:$0xff]
    %v311 = vld [vmem:[#allocation6 + $0x110] sm:$0xff]
    %v312 = vld [vmem:[#allocation6 + $0x118] sm:$0xff]
    %v313 = vld [vmem:[#allocation6 + $0x120] sm:$0xff]
    %v314 = vld [vmem:[#allocation6 + $0x128] sm:$0xff]
    %v315 = vld [vmem:[#allocation6 + $0x130] sm:$0xff]
    %v316 = vld [vmem:[#allocation6 + $0x138] sm:$0xff]
    %v317 = vld [vmem:[#allocation6 + $0x140] sm:$0xff]
    %v318 = vld [vmem:[#allocation6 + $0x148] sm:$0xff]
    %v319 = vld [vmem:[#allocation6 + $0x150] sm:$0xff]
    %v320 = vld [vmem:[#allocation6 + $0x158] sm:$0xff]
    %v321 = vld [vmem:[#allocation6 + $0x160] sm:$0xff]
    %v322 = vld [vmem:[#allocation6 + $0x168] sm:$0xff]
    %v323 = vld [vmem:[#allocation6 + $0x170] sm:$0xff]
    %v324 = vld [vmem:[#allocation6 + $0x178] sm:$0xff]
    %v325 = vld [vmem:[#allocation6 + $0x180] sm:$0xff]
    %v326 = vld [vmem:[#allocation6 + $0x188] sm:$0xff]
    %v327 = vld [vmem:[#allocation6 + $0x190] sm:$0xff]
    %v328 = vld [vmem:[#allocation6 + $0x198] sm:$0xff]
    %v329 = vld [vmem:[#allocation6 + $0x1a0] sm:$0xff]
    %v330 = vld [vmem:[#allocation6 + $0x1a8] sm:$0xff]
    %v331 = vld [vmem:[#allocation6 + $0x1b0] sm:$0xff]
    %v332 = vld [vmem:[#allocation6 + $0x1b8] sm:$0xff]
    %v333 = vld [vmem:[#allocation6 + $0x1c0] sm:$0xff]
    %v334 = vld [vmem:[#allocation6 + $0x1c8] sm:$0xff]
    %v335 = vld [vmem:[#allocation6 + $0x1d0] sm:$0xff]
    %v336 = vld [vmem:[#allocation6 + $0x1d8] sm:$0xff]
    %v337 = vld [vmem:[#allocation6 + $0x1e0] sm:$0xff]
    %v338 = vld [vmem:[#allocation6 + $0x1e8] sm:$0xff]
    %v339 = vld [vmem:[#allocation6 + $0x1f0] sm:$0xff]
    %v340 = vld [vmem:[#allocation6 + $0x1f8] sm:$0xff]
    %v341 = vld [vmem:[#allocation6 + $0x200] sm:$0xff]
    %v342 = vld [vmem:[#allocation6 + $0x208] sm:$0xff]
    %v343 = vld [vmem:[#allocation6 + $0x210] sm:$0xff]
    %v344 = vld [vmem:[#allocation6 + $0x218] sm:$0xff]
    %v345 = vld [vmem:[#allocation6 + $0x220] sm:$0xff]
    %v346 = vld [vmem:[#allocation6 + $0x228] sm:$0xff]
    %v347 = vld [vmem:[#allocation6 + $0x230] sm:$0xff]
    %v348 = vld [vmem:[#allocation6 + $0x238] sm:$0xff]
    %v349 = vld [vmem:[#allocation6 + $0x240] sm:$0xff]
    %v350 = vld [vmem:[#allocation6 + $0x248] sm:$0xff]
    %v351 = vld [vmem:[#allocation6 + $0x250] sm:$0xff]
    %v352 = vld [vmem:[#allocation6 + $0x258] sm:$0xff]
    %v353 = vld [vmem:[#allocation6 + $0x260] sm:$0xff]
    %v354 = vld [vmem:[#allocation6 + $0x268] sm:$0xff]
    %v355 = vld [vmem:[#allocation6 + $0x270] sm:$0xff]
    %v356 = vld [vmem:[#allocation6 + $0x278] sm:$0xff]
    %v357 = vld [vmem:[#allocation6 + $0x280] sm:$0xff]
    %v358 = vld [vmem:[#allocation6 + $0x288] sm:$0xff]
    %v359 = vld [vmem:[#allocation6 + $0x290] sm:$0xff]
    %v360 = vld [vmem:[#allocation6 + $0x298] sm:$0xff]
    %v361 = vld [vmem:[#allocation6 + $0x2a0] sm:$0xff]
    %v362 = vld [vmem:[#allocation6 + $0x2a8] sm:$0xff]
    %v363 = vld [vmem:[#allocation6 + $0x2b0] sm:$0xff]
    %v364 = vld [vmem:[#allocation6 + $0x2b8] sm:$0xff]
    %v365 = vld [vmem:[#allocation6 + $0x2c0] sm:$0xff]
    %v366 = vld [vmem:[#allocation6 + $0x2c8] sm:$0xff]
    %v367 = vld [vmem:[#allocation6 + $0x2d0] sm:$0xff]
    %v368 = vld [vmem:[#allocation6 + $0x2d8] sm:$0xff]
    %v369 = vld [vmem:[#allocation6 + $0x2e0] sm:$0xff]
    %v370 = vld [vmem:[#allocation6 + $0x2e8] sm:$0xff]
    %v371 = vld [vmem:[#allocation6 + $0x2f0] sm:$0xff]
    %v372 = vld [vmem:[#allocation6 + $0x2f8] sm:$0xff]
    %v373 = vld [vmem:[#allocation9] sm:$0x3f]
    %v470 = vunpack.c.l.b16 %v277
    %v471 = vunpack.c.h.b16 %v277
    %v472 = vunpack.c.l.b16 %v278
    %v473 = vunpack.c.h.b16 %v278
    %v474 = vunpack.c.l.b16 %v279
    %v475 = vunpack.c.h.b16 %v279
    %v476 = vunpack.c.l.b16 %v280
    %v477 = vunpack.c.h.b16 %v280
    %v478 = vunpack.c.l.b16 %v281
    %v479 = vunpack.c.h.b16 %v281
    %v480 = vunpack.c.l.b16 %v282
    %v481 = vunpack.c.h.b16 %v282
    %v482 = vunpack.c.l.b16 %v283
    %v483 = vunpack.c.h.b16 %v283
    %v484 = vunpack.c.l.b16 %v284
    %v485 = vunpack.c.h.b16 %v284
    %v486 = vunpack.c.l.b16 %v285
    %v487 = vunpack.c.h.b16 %v285
    %v488 = vunpack.c.l.b16 %v286
    %v489 = vunpack.c.h.b16 %v286
    %v490 = vunpack.c.l.b16 %v287
    %v491 = vunpack.c.h.b16 %v287
    %v492 = vunpack.c.l.b16 %v288
    %v493 = vunpack.c.h.b16 %v288
    %v494 = vunpack.c.l.b16 %v289
    %v495 = vunpack.c.h.b16 %v289
    %v496 = vunpack.c.l.b16 %v290
    %v497 = vunpack.c.h.b16 %v290
    %v498 = vunpack.c.l.b16 %v291
    %v499 = vunpack.c.h.b16 %v291
    %v500 = vunpack.c.l.b16 %v292
    %v501 = vunpack.c.h.b16 %v292
    %v502 = vunpack.c.l.b16 %v293
    %v503 = vunpack.c.h.b16 %v293
    %v504 = vunpack.c.l.b16 %v294
    %v505 = vunpack.c.h.b16 %v294
    %v506 = vunpack.c.l.b16 %v295
    %v507 = vunpack.c.h.b16 %v295
    %v508 = vunpack.c.l.b16 %v296
    %v509 = vunpack.c.h.b16 %v296
    %v510 = vunpack.c.l.b16 %v297
    %v511 = vunpack.c.h.b16 %v297
    %v512 = vunpack.c.l.b16 %v298
    %v513 = vunpack.c.h.b16 %v298
    %v514 = vunpack.c.l.b16 %v299
    %v515 = vunpack.c.h.b16 %v299
    %v516 = vunpack.c.l.b16 %v300
    %v517 = vunpack.c.h.b16 %v300
    %v518 = vunpack.c.l.b16 %v301
    %v519 = vunpack.c.h.b16 %v301
    %v520 = vunpack.c.l.b16 %v302
    %v521 = vunpack.c.h.b16 %v302
    %v522 = vunpack.c.l.b16 %v303
    %v523 = vunpack.c.h.b16 %v303
    %v524 = vunpack.c.l.b16 %v304
    %v525 = vunpack.c.h.b16 %v304
    %v526 = vunpack.c.l.b16 %v305
    %v527 = vunpack.c.h.b16 %v305
    %v528 = vunpack.c.l.b16 %v306
    %v529 = vunpack.c.h.b16 %v306
    %v530 = vunpack.c.l.b16 %v307
    %v531 = vunpack.c.h.b16 %v307
    %v532 = vunpack.c.l.b16 %v308
    %v533 = vunpack.c.h.b16 %v308
    %v534 = vunpack.c.l.b16 %v309
    %v535 = vunpack.c.h.b16 %v309
    %v536 = vunpack.c.l.b16 %v310
    %v537 = vunpack.c.h.b16 %v310
    %v538 = vunpack.c.l.b16 %v311
    %v539 = vunpack.c.h.b16 %v311
    %v540 = vunpack.c.l.b16 %v312
    %v541 = vunpack.c.h.b16 %v312
    %v542 = vunpack.c.l.b16 %v313
    %v543 = vunpack.c.h.b16 %v313
    %v544 = vunpack.c.l.b16 %v314
    %v545 = vunpack.c.h.b16 %v314
    %v546 = vunpack.c.l.b16 %v315
    %v547 = vunpack.c.h.b16 %v315
    %v548 = vunpack.c.l.b16 %v316
    %v549 = vunpack.c.h.b16 %v316
    %v550 = vunpack.c.l.b16 %v317
    %v551 = vunpack.c.h.b16 %v317
    %v552 = vunpack.c.l.b16 %v318
    %v553 = vunpack.c.h.b16 %v318
    %v554 = vunpack.c.l.b16 %v319
    %v555 = vunpack.c.h.b16 %v319
    %v556 = vunpack.c.l.b16 %v320
    %v557 = vunpack.c.h.b16 %v320
    %v558 = vunpack.c.l.b16 %v321
    %v559 = vunpack.c.h.b16 %v321
    %v560 = vunpack.c.l.b16 %v322
    %v561 = vunpack.c.h.b16 %v322
    %v562 = vunpack.c.l.b16 %v323
    %v563 = vunpack.c.h.b16 %v323
    %v564 = vunpack.c.l.b16 %v324
    %v565 = vunpack.c.h.b16 %v324
    %v566 = vunpack.c.l.b16 %v325
    %v567 = vunpack.c.h.b16 %v325
    %v568 = vunpack.c.l.b16 %v326
    %v569 = vunpack.c.h.b16 %v326
    %v570 = vunpack.c.l.b16 %v327
    %v571 = vunpack.c.h.b16 %v327
    %v572 = vunpack.c.l.b16 %v328
    %v573 = vunpack.c.h.b16 %v328
    %v574 = vunpack.c.l.b16 %v329
    %v575 = vunpack.c.h.b16 %v329
    %v576 = vunpack.c.l.b16 %v330
    %v577 = vunpack.c.h.b16 %v330
    %v578 = vunpack.c.l.b16 %v331
    %v579 = vunpack.c.h.b16 %v331
    %v580 = vunpack.c.l.b16 %v332
    %v581 = vunpack.c.h.b16 %v332
    %v582 = vunpack.c.l.b16 %v333
    %v583 = vunpack.c.h.b16 %v333
    %v584 = vunpack.c.l.b16 %v334
    %v585 = vunpack.c.h.b16 %v334
    %v586 = vunpack.c.l.b16 %v335
    %v587 = vunpack.c.h.b16 %v335
    %v588 = vunpack.c.l.b16 %v336
    %v589 = vunpack.c.h.b16 %v336
    %v590 = vunpack.c.l.b16 %v337
    %v591 = vunpack.c.h.b16 %v337
    %v592 = vunpack.c.l.b16 %v338
    %v593 = vunpack.c.h.b16 %v338
    %v594 = vunpack.c.l.b16 %v339
    %v595 = vunpack.c.h.b16 %v339
    %v596 = vunpack.c.l.b16 %v340
    %v597 = vunpack.c.h.b16 %v340
    %v598 = vunpack.c.l.b16 %v341
    %v599 = vunpack.c.h.b16 %v341
    %v600 = vunpack.c.l.b16 %v342
    %v601 = vunpack.c.h.b16 %v342
    %v602 = vunpack.c.l.b16 %v343
    %v603 = vunpack.c.h.b16 %v343
    %v604 = vunpack.c.l.b16 %v344
    %v605 = vunpack.c.h.b16 %v344
    %v606 = vunpack.c.l.b16 %v345
    %v607 = vunpack.c.h.b16 %v345
    %v608 = vunpack.c.l.b16 %v346
    %v609 = vunpack.c.h.b16 %v346
    %v610 = vunpack.c.l.b16 %v347
    %v611 = vunpack.c.h.b16 %v347
    %v612 = vunpack.c.l.b16 %v348
    %v613 = vunpack.c.h.b16 %v348
    %v614 = vunpack.c.l.b16 %v349
    %v615 = vunpack.c.h.b16 %v349
    %v616 = vunpack.c.l.b16 %v350
    %v617 = vunpack.c.h.b16 %v350
    %v618 = vunpack.c.l.b16 %v351
    %v619 = vunpack.c.h.b16 %v351
    %v620 = vunpack.c.l.b16 %v352
    %v621 = vunpack.c.h.b16 %v352
    %v622 = vunpack.c.l.b16 %v353
    %v623 = vunpack.c.h.b16 %v353
    %v624 = vunpack.c.l.b16 %v354
    %v625 = vunpack.c.h.b16 %v354
    %v626 = vunpack.c.l.b16 %v355
    %v627 = vunpack.c.h.b16 %v355
    %v628 = vunpack.c.l.b16 %v356
    %v629 = vunpack.c.h.b16 %v356
    %v630 = vunpack.c.l.b16 %v357
    %v631 = vunpack.c.h.b16 %v357
    %v632 = vunpack.c.l.b16 %v358
    %v633 = vunpack.c.h.b16 %v358
    %v634 = vunpack.c.l.b16 %v359
    %v635 = vunpack.c.h.b16 %v359
    %v636 = vunpack.c.l.b16 %v360
    %v637 = vunpack.c.h.b16 %v360
    %v638 = vunpack.c.l.b16 %v361
    %v639 = vunpack.c.h.b16 %v361
    %v640 = vunpack.c.l.b16 %v362
    %v641 = vunpack.c.h.b16 %v362
    %v642 = vunpack.c.l.b16 %v363
    %v643 = vunpack.c.h.b16 %v363
    %v644 = vunpack.c.l.b16 %v364
    %v645 = vunpack.c.h.b16 %v364
    %v646 = vunpack.c.l.b16 %v365
    %v647 = vunpack.c.h.b16 %v365
    %v648 = vunpack.c.l.b16 %v366
    %v649 = vunpack.c.h.b16 %v366
    %v650 = vunpack.c.l.b16 %v367
    %v651 = vunpack.c.h.b16 %v367
    %v652 = vunpack.c.l.b16 %v368
    %v653 = vunpack.c.h.b16 %v368
    %v654 = vunpack.c.l.b16 %v369
    %v655 = vunpack.c.h.b16 %v369
    %v656 = vunpack.c.l.b16 %v370
    %v657 = vunpack.c.h.b16 %v370
    %v658 = vunpack.c.l.b16 %v371
    %v659 = vunpack.c.h.b16 %v371
    %v660 = vunpack.c.l.b16 %v372
    %v661 = vunpack.c.h.b16 %v372
    %v662 = vpack.c.b16 %v476, %v470
    %v663 = vpack.c.b16 %v477, %v471
    %v664 = vpack.c.b16 %v478, %v472
    %v665 = vpack.c.b16 %v479, %v473
    %v666 = vpack.c.b16 %v480, %v474
    %v667 = vpack.c.b16 %v481, %v475
    %v668 = vpack.c.b16 %v488, %v482
    %v669 = vpack.c.b16 %v489, %v483
    %v670 = vpack.c.b16 %v490, %v484
    %v671 = vpack.c.b16 %v491, %v485
    %v672 = vpack.c.b16 %v492, %v486
    %v673 = vpack.c.b16 %v493, %v487
    %v674 = vpack.c.b16 %v500, %v494
    %v675 = vpack.c.b16 %v501, %v495
    %v676 = vpack.c.b16 %v502, %v496
    %v677 = vpack.c.b16 %v503, %v497
    %v678 = vpack.c.b16 %v504, %v498
    %v679 = vpack.c.b16 %v505, %v499
    %v680 = vpack.c.b16 %v512, %v506
    %v681 = vpack.c.b16 %v513, %v507
    %v682 = vpack.c.b16 %v514, %v508
    %v683 = vpack.c.b16 %v515, %v509
    %v684 = vpack.c.b16 %v516, %v510
    %v685 = vpack.c.b16 %v517, %v511
    %v686 = vpack.c.b16 %v524, %v518
    %v687 = vpack.c.b16 %v525, %v519
    %v688 = vpack.c.b16 %v526, %v520
    %v689 = vpack.c.b16 %v527, %v521
    %v690 = vpack.c.b16 %v528, %v522
    %v691 = vpack.c.b16 %v529, %v523
    %v692 = vpack.c.b16 %v536, %v530
    %v693 = vpack.c.b16 %v537, %v531
    %v694 = vpack.c.b16 %v538, %v532
    %v695 = vpack.c.b16 %v539, %v533
    %v696 = vpack.c.b16 %v540, %v534
    %v697 = vpack.c.b16 %v541, %v535
    %v698 = vpack.c.b16 %v548, %v542
    %v699 = vpack.c.b16 %v549, %v543
    %v700 = vpack.c.b16 %v550, %v544
    %v701 = vpack.c.b16 %v551, %v545
    %v702 = vpack.c.b16 %v552, %v546
    %v703 = vpack.c.b16 %v553, %v547
    %v704 = vpack.c.b16 %v560, %v554
    %v705 = vpack.c.b16 %v561, %v555
    %v706 = vpack.c.b16 %v562, %v556
    %v707 = vpack.c.b16 %v563, %v557
    %v708 = vpack.c.b16 %v564, %v558
    %v709 = vpack.c.b16 %v565, %v559
    %v710 = vpack.c.b16 %v572, %v566
    %v711 = vpack.c.b16 %v573, %v567
    %v712 = vpack.c.b16 %v574, %v568
    %v713 = vpack.c.b16 %v575, %v569
    %v714 = vpack.c.b16 %v576, %v570
    %v715 = vpack.c.b16 %v577, %v571
    %v716 = vpack.c.b16 %v584, %v578
    %v717 = vpack.c.b16 %v585, %v579
    %v718 = vpack.c.b16 %v586, %v580
    %v719 = vpack.c.b16 %v587, %v581
    %v720 = vpack.c.b16 %v588, %v582
    %v721 = vpack.c.b16 %v589, %v583
    %v722 = vpack.c.b16 %v596, %v590
    %v723 = vpack.c.b16 %v597, %v591
    %v724 = vpack.c.b16 %v598, %v592
    %v725 = vpack.c.b16 %v599, %v593
    %v726 = vpack.c.b16 %v600, %v594
    %v727 = vpack.c.b16 %v601, %v595
    %v728 = vpack.c.b16 %v608, %v602
    %v729 = vpack.c.b16 %v609, %v603
    %v730 = vpack.c.b16 %v610, %v604
    %v731 = vpack.c.b16 %v611, %v605
    %v732 = vpack.c.b16 %v612, %v606
    %v733 = vpack.c.b16 %v613, %v607
    %v734 = vpack.c.b16 %v620, %v614
    %v735 = vpack.c.b16 %v621, %v615
    %v736 = vpack.c.b16 %v622, %v616
    %v737 = vpack.c.b16 %v623, %v617
    %v738 = vpack.c.b16 %v624, %v618
    %v739 = vpack.c.b16 %v625, %v619
    %v740 = vpack.c.b16 %v632, %v626
    %v741 = vpack.c.b16 %v633, %v627
    %v742 = vpack.c.b16 %v634, %v628
    %v743 = vpack.c.b16 %v635, %v629
    %v744 = vpack.c.b16 %v636, %v630
    %v745 = vpack.c.b16 %v637, %v631
    %v746 = vpack.c.b16 %v644, %v638
    %v747 = vpack.c.b16 %v645, %v639
    %v748 = vpack.c.b16 %v646, %v640
    %v749 = vpack.c.b16 %v647, %v641
    %v750 = vpack.c.b16 %v648, %v642
    %v751 = vpack.c.b16 %v649, %v643
    %v752 = vpack.c.b16 %v656, %v650
    %v753 = vpack.c.b16 %v657, %v651
    %v754 = vpack.c.b16 %v658, %v652
    %v755 = vpack.c.b16 %v659, %v653
    %v756 = vpack.c.b16 %v660, %v654
    %v757 = vpack.c.b16 %v661, %v655
    %v855 = vperm.slane %v373, 0
    %v856 = vperm.slane %v373, 1
    %v857 = vperm.slane %v373, 2
    %v858 = vperm.slane %v373, 3
    %v859 = vperm.slane %v373, 4
    %v860 = vperm.slane %v373, 5
    %867 = vmatpush.bf16.msra.mxu0 %v704
    %868 = vmatpush.bf16.msra.mxu0 %v698
    %869 = vmatpush.bf16.msra.mxu0 %v692
    %870 = vmatpush.bf16.msra.mxu0 %v686
    %871 = vmatpush.bf16.msra.mxu0 %v680
    %872 = vmatpush.bf16.msra.mxu0 %v674
    %873 = vmatpush.bf16.msra.mxu0 %v668
    %874 = vmatpush.bf16.msra.mxu0 %v662
    %875 = vmatmul.bf16.gmra.mxu0 %v275
    %v876 = vpop.f32.mrf.mxu0
    %v877 = vadd.f32 %v855, %v876
    %v878 = vpop.f32.mrf.mxu0
    %879 = vdwg.mxu0
    %880 = vmatpush.bf16.msra.mxu0 %v752
    %881 = vmatpush.bf16.msra.mxu0 %v746
    %882 = vmatpush.bf16.msra.mxu0 %v740
    %883 = vmatpush.bf16.msra.mxu0 %v734
    %884 = vmatpush.bf16.msra.mxu0 %v728
    %885 = vmatpush.bf16.msra.mxu0 %v722
    %886 = vmatpush.bf16.msra.mxu0 %v716
    %887 = vmatpush.bf16.msra.mxu0 %v710
    %888 = vmatmul.bf16.gmra.mxu0 %v276
    %v889 = vpop.f32.mrf.mxu0
    %v890 = vadd.f32 %v877, %v889
    %v891 = vpop.f32.mrf.mxu0
    %892 = vdwg.mxu0
    %893 = vmatpush.bf16.msra.mxu0 %v705
    %894 = vmatpush.bf16.msra.mxu0 %v699
    %895 = vmatpush.bf16.msra.mxu0 %v693
    %896 = vmatpush.bf16.msra.mxu0 %v687
    %897 = vmatpush.bf16.msra.mxu0 %v681
    %898 = vmatpush.bf16.msra.mxu0 %v675
    %899 = vmatpush.bf16.msra.mxu0 %v669
    %900 = vmatpush.bf16.msra.mxu0 %v663
    %901 = vmatmul.bf16.gmra.mxu0 %v275
    %v902 = vpop.f32.mrf.mxu0
    %v903 = vadd.f32 %v856, %v902
    %v904 = vpop.f32.mrf.mxu0
    %905 = vdwg.mxu0
    %906 = vmatpush.bf16.msra.mxu0 %v753
    %907 = vmatpush.bf16.msra.mxu0 %v747
    %908 = vmatpush.bf16.msra.mxu0 %v741
    %909 = vmatpush.bf16.msra.mxu0 %v735
    %910 = vmatpush.bf16.msra.mxu0 %v729
    %911 = vmatpush.bf16.msra.mxu0 %v723
    %912 = vmatpush.bf16.msra.mxu0 %v717
    %913 = vmatpush.bf16.msra.mxu0 %v711
    %914 = vmatmul.bf16.gmra.mxu0 %v276
    %v915 = vpop.f32.mrf.mxu0
    %v916 = vadd.f32 %v903, %v915
    %v917 = vpop.f32.mrf.mxu0
    %918 = vdwg.mxu0
    %919 = vmatpush.bf16.msra.mxu0 %v706
    %920 = vmatpush.bf16.msra.mxu0 %v700
    %921 = vmatpush.bf16.msra.mxu0 %v694
    %922 = vmatpush.bf16.msra.mxu0 %v688
    %923 = vmatpush.bf16.msra.mxu0 %v682
    %924 = vmatpush.bf16.msra.mxu0 %v676
    %925 = vmatpush.bf16.msra.mxu0 %v670
    %926 = vmatpush.bf16.msra.mxu0 %v664
    %927 = vmatmul.bf16.gmra.mxu0 %v275
    %v928 = vpop.f32.mrf.mxu0
    %v929 = vadd.f32 %v857, %v928
    %v930 = vpop.f32.mrf.mxu0
    %931 = vdwg.mxu0
    %932 = vmatpush.bf16.msra.mxu0 %v754
    %933 = vmatpush.bf16.msra.mxu0 %v748
    %934 = vmatpush.bf16.msra.mxu0 %v742
    %935 = vmatpush.bf16.msra.mxu0 %v736
    %936 = vmatpush.bf16.msra.mxu0 %v730
    %937 = vmatpush.bf16.msra.mxu0 %v724
    %938 = vmatpush.bf16.msra.mxu0 %v718
    %939 = vmatpush.bf16.msra.mxu0 %v712
    %940 = vmatmul.bf16.gmra.mxu0 %v276
    %v941 = vpop.f32.mrf.mxu0
    %v942 = vadd.f32 %v929, %v941
    %v943 = vpop.f32.mrf.mxu0
    %944 = vdwg.mxu0
    %945 = vmatpush.bf16.msra.mxu0 %v707
    %946 = vmatpush.bf16.msra.mxu0 %v701
    %947 = vmatpush.bf16.msra.mxu0 %v695
    %948 = vmatpush.bf16.msra.mxu0 %v689
    %949 = vmatpush.bf16.msra.mxu0 %v683
    %950 = vmatpush.bf16.msra.mxu0 %v677
    %951 = vmatpush.bf16.msra.mxu0 %v671
    %952 = vmatpush.bf16.msra.mxu0 %v665
    %953 = vmatmul.bf16.gmra.mxu0 %v275
    %v954 = vpop.f32.mrf.mxu0
    %v955 = vadd.f32 %v858, %v954
    %v956 = vpop.f32.mrf.mxu0
    %957 = vdwg.mxu0
    %958 = vmatpush.bf16.msra.mxu0 %v755
    %959 = vmatpush.bf16.msra.mxu0 %v749
    %960 = vmatpush.bf16.msra.mxu0 %v743
    %961 = vmatpush.bf16.msra.mxu0 %v737
    %962 = vmatpush.bf16.msra.mxu0 %v731
    %963 = vmatpush.bf16.msra.mxu0 %v725
    %964 = vmatpush.bf16.msra.mxu0 %v719
    %965 = vmatpush.bf16.msra.mxu0 %v713
    %966 = vmatmul.bf16.gmra.mxu0 %v276
    %v967 = vpop.f32.mrf.mxu0
    %v968 = vadd.f32 %v955, %v967
    %v969 = vpop.f32.mrf.mxu0
    %970 = vdwg.mxu0
    %971 = vmatpush.bf16.msra.mxu0 %v708
    %972 = vmatpush.bf16.msra.mxu0 %v702
    %973 = vmatpush.bf16.msra.mxu0 %v696
    %974 = vmatpush.bf16.msra.mxu0 %v690
    %975 = vmatpush.bf16.msra.mxu0 %v684
    %976 = vmatpush.bf16.msra.mxu0 %v678
    %977 = vmatpush.bf16.msra.mxu0 %v672
    %978 = vmatpush.bf16.msra.mxu0 %v666
    %979 = vmatmul.bf16.gmra.mxu0 %v275
    %v980 = vpop.f32.mrf.mxu0
    %v981 = vadd.f32 %v859, %v980
    %v982 = vpop.f32.mrf.mxu0
    %983 = vdwg.mxu0
    %984 = vmatpush.bf16.msra.mxu0 %v756
    %985 = vmatpush.bf16.msra.mxu0 %v750
    %986 = vmatpush.bf16.msra.mxu0 %v744
    %987 = vmatpush.bf16.msra.mxu0 %v738
    %988 = vmatpush.bf16.msra.mxu0 %v732
    %989 = vmatpush.bf16.msra.mxu0 %v726
    %990 = vmatpush.bf16.msra.mxu0 %v720
    %991 = vmatpush.bf16.msra.mxu0 %v714
    %992 = vmatmul.bf16.gmra.mxu0 %v276
    %v993 = vpop.f32.mrf.mxu0
    %v994 = vadd.f32 %v981, %v993
    %v995 = vpop.f32.mrf.mxu0
    %996 = vdwg.mxu0
    %997 = vmatpush.bf16.msra.mxu0 %v709
    %998 = vmatpush.bf16.msra.mxu0 %v703
    %999 = vmatpush.bf16.msra.mxu0 %v697
    %1000 = vmatpush.bf16.msra.mxu0 %v691
    %1001 = vmatpush.bf16.msra.mxu0 %v685
    %1002 = vmatpush.bf16.msra.mxu0 %v679
    %1003 = vmatpush.bf16.msra.mxu0 %v673
    %1004 = vmatpush.bf16.msra.mxu0 %v667
    %1005 = vmatmul.bf16.gmra.mxu0 %v275
    %v1006 = vpop.f32.mrf.mxu0
    %v1007 = vadd.f32 %v860, %v1006
    %v1008 = vpop.f32.mrf.mxu0
    %1009 = vdwg.mxu0
    %1010 = vmatpush.bf16.msra.mxu0 %v757
    %1011 = vmatpush.bf16.msra.mxu0 %v751
    %1012 = vmatpush.bf16.msra.mxu0 %v745
    %1013 = vmatpush.bf16.msra.mxu0 %v739
    %1014 = vmatpush.bf16.msra.mxu0 %v733
    %1015 = vmatpush.bf16.msra.mxu0 %v727
    %1016 = vmatpush.bf16.msra.mxu0 %v721
    %1017 = vmatpush.bf16.msra.mxu0 %v715
    %1018 = vmatmul.bf16.gmra.mxu0 %v276
    %v1019 = vpop.f32.mrf.mxu0
    %v1020 = vadd.f32 %v1007, %v1019
    %v1021 = vpop.f32.mrf.mxu0
    %1022 = vdwg.mxu0
    %v1023 = vadd.f32 %v202, %v890
    %v1024 = vadd.f32 %v215, %v916
    %v1025 = vadd.f32 %v228, %v942
    %v1026 = vadd.f32 %v241, %v968
    %v1027 = vxor.u32 %v1023, 2147483648
    %v1028 = vxor.u32 %v1024, 2147483648
    %v1029 = vxor.u32 %v1025, 2147483648
    %v1030 = vxor.u32 %v1026, 2147483648
    %v1031 = vmul.f32 %v1027, 1.442695
    %v1032 = vpow.pop %v1031
    %v1033 = vmul.f32 %v1028, 1.442695
    %v1034 = vpow.pop %v1033
    %v1035 = vmul.f32 %v1029, 1.442695
    %v1036 = vpow.pop %v1035
    %v1037 = vmul.f32 %v1030, 1.442695
    %v1038 = vpow.pop %v1037
    %v1039 = vadd.f32 %v1032, 1.0
    %v1040 = vadd.f32 %v1034, 1.0
    %v1041 = vadd.f32 %v1036, 1.0
    %v1042 = vadd.f32 %v1038, 1.0
    %v1043 = vrcp.pop %v1039
    %v1044 = vmul.f32 %v1039, %v1043
    %v1045 = vsub.f32 1.0, %v1044
    %v1046 = vmul.f32 %v1043, %v1045
    %v1047 = vadd.f32 %v1043, %v1046
    %vm1048 = vweird.f32 %v1039
    %vm1049 = vweird.f32 %v1043
    %vm1050 = vmor %vm1048, %vm1049
    %v1051 = vsel %vm1050, %v1043, %v1047
    %v1052 = vand.u32 2147483647, %v1039
    %vm1053 = vcmp.eq.f32.partialorder %v1052, 8.507059e+37
    %v1054 = vand.u32 %v1039, 2147483648
    %v1055 = vor.u32 1.1754944e-38, %v1054
    %v1056 = vsel %vm1053, %v1055, %v1051
    %v1057 = vmul.f32 1.0, %v1056
    %v1058 = vrcp.pop %v1040
    %v1059 = vmul.f32 %v1040, %v1058
    %v1060 = vsub.f32 1.0, %v1059
    %v1061 = vmul.f32 %v1058, %v1060
    %v1062 = vadd.f32 %v1058, %v1061
    %vm1063 = vweird.f32 %v1040
    %vm1064 = vweird.f32 %v1058
    %vm1065 = vmor %vm1063, %vm1064
    %v1066 = vsel %vm1065, %v1058, %v1062
    %v1067 = vand.u32 2147483647, %v1040
    %vm1068 = vcmp.eq.f32.partialorder %v1067, 8.507059e+37
    %v1069 = vand.u32 %v1040, 2147483648
    %v1070 = vor.u32 1.1754944e-38, %v1069
    %v1071 = vsel %vm1068, %v1070, %v1066
    %v1072 = vmul.f32 1.0, %v1071
    %v1073 = vrcp.pop %v1041
    %v1074 = vmul.f32 %v1041, %v1073
    %v1075 = vsub.f32 1.0, %v1074
    %v1076 = vmul.f32 %v1073, %v1075
    %v1077 = vadd.f32 %v1073, %v1076
    %vm1078 = vweird.f32 %v1041
    %vm1079 = vweird.f32 %v1073
    %vm1080 = vmor %vm1078, %vm1079
    %v1081 = vsel %vm1080, %v1073, %v1077
    %v1082 = vand.u32 2147483647, %v1041
    %vm1083 = vcmp.eq.f32.partialorder %v1082, 8.507059e+37
    %v1084 = vand.u32 %v1041, 2147483648
    %v1085 = vor.u32 1.1754944e-38, %v1084
    %v1086 = vsel %vm1083, %v1085, %v1081
    %v1087 = vmul.f32 1.0, %v1086
    %v1088 = vrcp.pop %v1042
    %v1089 = vmul.f32 %v1042, %v1088
    %v1090 = vsub.f32 1.0, %v1089
    %v1091 = vmul.f32 %v1088, %v1090
    %v1092 = vadd.f32 %v1088, %v1091
    %vm1093 = vweird.f32 %v1042
    %vm1094 = vweird.f32 %v1088
    %vm1095 = vmor %vm1093, %vm1094
    %v1096 = vsel %vm1095, %v1088, %v1092
    %v1097 = vand.u32 2147483647, %v1042
    %vm1098 = vcmp.eq.f32.partialorder %v1097, 8.507059e+37
    %v1099 = vand.u32 %v1042, 2147483648
    %v1100 = vor.u32 1.1754944e-38, %v1099
    %v1101 = vsel %vm1098, %v1100, %v1096
    %v1102 = vmul.f32 1.0, %v1101
    %v1103 = vmul.f32 %v1057, %v994
    %v1104 = vmul.f32 %v1072, %v1020
    %v1105 = vadd.f32 %v254, %v1103
    %v1106 = vadd.f32 %v267, %v1104
    %v1107 = vtanh.pop %v1105
    %v1108 = vtanh.pop %v1106
    %v1109 = vsub.f32 1.0, %v1087
    %v1110 = vsub.f32 1.0, %v1102
    %v1111 = vmul.f32 %v1109, %v1107
    %v1112 = vmul.f32 %v1110, %v1108
    %v1113 = vmul.f32 %v1087, %v271
    %v1114 = vmul.f32 %v1102, %v272
    %v1115 = vadd.f32 %v1111, %v1113
    %v1116 = vadd.f32 %v1112, %v1114
    %v1119 = vrot.slane %v1116, 7
    %vm1120 = vcmask 1040384
    %v1121 = vsel %vm1120, %v1115, %v1119
    %v1123 = vlaneseq
    %vm1124 = vcmp.ge.s32.totalorder %v1123, 0
    %vm1125 = vcmp.lt.s32.totalorder %v1123, 256
    %vm1126 = vmand %vm1124, %vm1125
    %1127 = vst.msk [vmem:[%s7] sm:$0x3] %vm1126, %v1121
    // Predicated region
    $region42: #{encoder_gru_step.1} parent=1 // pred_check
      _
    $region43: #{encoder_gru_step.1} parent=1 // pred_check_branch
      %1129 = sbr.rel (0) target = $region45
    $region44: #{encoder_gru_step.1} parent=1 // pred_region
      _
    $region45: #{encoder_gru_step.1} parent=1 // pred_fallthru
      _
    // Predicated region
    $region46: #{encoder_gru_step.1} parent=1 // pred_check
      _
    $region47: #{encoder_gru_step.1} parent=1 // pred_check_branch
      %1131 = sbr.rel (0) target = $region49
    $region48: #{encoder_gru_step.1} parent=1 // pred_region
      _
    $region49: #{encoder_gru_step.1} parent=1 // pred_fallthru
      _
    %1132 = vsyncpa [#allocation5], 1
    %1133 = vsyncpa [#allocation7], 1
    %1134 = vsyncpa [#allocation10], 1

</llo_original>
